<compile_context>
chip_gen: v5e
topology: v5e:2x2
jax: 0.10.0
libtpu: 0.0.40
codegen_flags: <defaults>
</compile_context>

<pallas_src>
import functools
import math

import jax
import jax.numpy as jnp
from jax.experimental import pallas as pl
from jax.experimental.pallas import tpu as pltpu


def _linearizer_kernel(x_ref, o_ref, *, scale: float):
    # Widen once on the VPU, then 2 VALU ops (mul + sub).
    o_ref[...] = x_ref[...].astype(jnp.float32) * scale - 1.0


def _pick_lane_width(n: int, lane_width: int):
    """Largest lane-dense width (multiple of 128) <= lane_width dividing n."""
    for cand in (1024, 512, 256, 128):
        if cand <= lane_width and n % cand == 0:
            return cand
    return None


def _pick_block_rows(rows: int, itemsize: int, block_rows: int):
    """Row-tile that respects sublane packing and gives >= 2 grid blocks."""
    # Sublane granularity of the packed input dtype:
    # 8-bit -> 32 rows, 16-bit -> 16 rows, 32-bit -> 8 rows.
    min_rows = 8 * max(1, 4 // int(itemsize))
    bm = min(block_rows, rows)
    bm = max((bm // min_rows) * min_rows, min_rows)
    # Make sure both v7x TensorCores get at least one block when possible.
    if pl.cdiv(rows, bm) < 2 and rows >= 2 * min_rows:
        bm = max((pl.cdiv(rows, 2) // min_rows) * min_rows, min_rows)
    return bm, min_rows


def linearizer(x: jax.Array, class_size: int, *,
               block_rows: int = 512, lane_width: int = 1024,
               min_pallas_elems: int = 1 << 20) -> jax.Array:
    """Apply Linearizer.forward elementwise to an array of class indices."""
    scale = 2.0 / float(class_size)
    orig_shape = x.shape
    n = math.prod(orig_shape) if orig_shape else 1

    def _plain(v):
        # Tiny / awkward shapes: let XLA fuse the 2-op expression into the
        # consumer instead of paying a standalone launch (or pad/slice passes).
        return v.astype(jnp.float32) * scale - 1.0

    if n < min_pallas_elems:
        return _plain(x)

    bn = _pick_lane_width(n, lane_width)
    if bn is None:
        # No lane-dense width divides n; padding + slicing would add two full
        # extra HBM passes, so the plain expression is strictly better.
        return _plain(x)

    rows = n // bn
    itemsize = jnp.dtype(x.dtype).itemsize
    bm, min_rows = _pick_block_rows(rows, itemsize, block_rows)
    if rows < min_rows:
        return _plain(x)

    # Contiguous reshape: no HBM pass; the kernel reads x's original dtype
    # directly (narrow-read fast path only if the caller already stores
    # uint8/int16 indices).
    x2d = x.reshape(rows, bn)
    grid = (pl.cdiv(rows, bm),)   # ragged final block is masked by Pallas

    kernel = functools.partial(_linearizer_kernel, scale=scale)

    out2d = pl.pallas_call(
        kernel,
        out_shape=jax.ShapeDtypeStruct((rows, bn), jnp.float32),
        grid_spec=pltpu.PrefetchScalarGridSpec(
            num_scalar_prefetch=0,
            grid=grid,
            in_specs=[pl.BlockSpec((bm, bn), lambda i: (i, 0))],
            out_specs=pl.BlockSpec((bm, bn), lambda i: (i, 0)),
        ),
        compiler_params=pltpu.CompilerParams(
            dimension_semantics=("parallel",),
            vmem_limit_bytes=32 << 20,   # ~8 MiB actually used at 512x1024
        ),
    )(x2d)

    return out2d.reshape(orig_shape)


if __name__ == "__main__":
    class_size = 256
    key = jax.random.PRNGKey(0)

    def ref_fn(v):
        # Reference (plain JAX, mirrors the PyTorch semantics exactly).
        return (v.astype(jnp.float32) / class_size - 0.5) * 2.0

    # 1) Module-typical tiny input: takes the fused plain-JAX early-exit path.
    x_small = jax.random.randint(key, (2, 4, 16, 16), minval=0,
                                 maxval=class_size, dtype=jnp.int32)
    out_small = jax.block_until_ready(linearizer(x_small, class_size))
    assert out_small.shape == x_small.shape and out_small.dtype == jnp.float32
    assert jnp.allclose(out_small, ref_fn(x_small), atol=1e-6)

    k1, k2 = jax.random.split(key)

    # 2) Force the Pallas path at a modest lane-dense shape (int32 input).
    x_med = jax.random.randint(k1, (32, 1024), minval=0,
                               maxval=class_size, dtype=jnp.int32)
    out_med = jax.block_until_ready(
        linearizer(x_med, class_size, min_pallas_elems=0))
    assert out_med.shape == x_med.shape and out_med.dtype == jnp.float32
    assert jnp.allclose(out_med, ref_fn(x_med), atol=1e-6)

    # 3) Already-narrow (uint8) input: kernel reads uint8 directly, no wrapper
    #    cast, 4x less HBM read traffic.
    x_u8 = jax.random.randint(k2, (64, 1024), minval=0,
                              maxval=class_size, dtype=jnp.int32).astype(jnp.uint8)
    out_u8 = jax.block_until_ready(
        linearizer(x_u8, class_size, min_pallas_elems=0))
    assert out_u8.shape == x_u8.shape and out_u8.dtype == jnp.float32
    assert jnp.allclose(out_u8, ref_fn(x_u8), atol=1e-6)

    print("KERNEL_OK")
</pallas_src>

<mosaic_0001>
module attributes {stable_mosaic.version = 11 : i64} {
  func.func @_linearizer_kernel(%arg0: i32, %arg1: memref<16x1024xi32, #tpu.memory_space<vmem>>, %arg2: memref<16x1024xf32, #tpu.memory_space<vmem>>) attributes {dimension_semantics = [#tpu.dimension_semantics<parallel>], iteration_bounds = array<i64: 2>, scalar_prefetch = 0 : i64, scratch_operands = 0 : i64, tpu.core_type = #tpu.core_type<tc>, window_params = [{transform_indices = @transform_0, window_bounds = array<i64: 16, 1024>}, {transform_indices = @transform_1, window_bounds = array<i64: 16, 1024>}]} {
    %c0 = arith.constant 0 : index
    %c0_0 = arith.constant 0 : index
    %0 = vector.load %arg1[%c0, %c0_0] : memref<16x1024xi32, #tpu.memory_space<vmem>>, vector<16x1024xi32>
    %1 = arith.sitofp %0 : vector<16x1024xi32> to vector<16x1024xf32>
    %cst = arith.constant 7.812500e-03 : f32
    %2 = vector.broadcast %cst : f32 to vector<16x1024xf32>
    %3 = arith.mulf %1, %2 : vector<16x1024xf32>
    %cst_1 = arith.constant 1.000000e+00 : f32
    %4 = vector.broadcast %cst_1 : f32 to vector<16x1024xf32>
    %5 = arith.subf %3, %4 : vector<16x1024xf32>
    %c0_2 = arith.constant 0 : index
    %c0_3 = arith.constant 0 : index
    %6 = vector.load %arg2[%c0_2, %c0_3] : memref<16x1024xf32, #tpu.memory_space<vmem>>, vector<16x1024xf32>
    tpu.vector_store %arg2[%c0_2, %c0_3], %5 {strides = array<i32>} : memref<16x1024xf32, #tpu.memory_space<vmem>>, vector<16x1024xf32>,
    return
  }
  func.func @transform_0(%arg0: i32) -> (i32, i32) {
    %c0_i32 = arith.constant 0 : i32
    %c0_i32_0 = arith.constant 0 : i32
    return %arg0, %c0_i32 : i32, i32
  }
  func.func @transform_1(%arg0: i32) -> (i32, i32) {
    %c0_i32 = arith.constant 0 : i32
    %c0_i32_0 = arith.constant 0 : i32
    return %arg0, %c0_i32 : i32, i32
  }
}

</mosaic_0001>

<llo_original>
// kernel: tpu_custom_call.1
$region0: #{tpu_custom_call.1}
  #allocation0 [shape = 'u32[]', space=smem, size = 0x4, offset = 0x4, fixed_abs, tag = 'smem constant byte address 0x4 - core index']
  #allocation1 [shape = 'u32[72,128]{1,0:T(1,128)}', space=vmem, size = 0x9000, scoped, tag = 'internal scratch']
  %s0 = inlined_call_operand.hbm [shape: s32[32,1024], index: 0, kind: input, shape index: {}]
  %s1 = inlined_call_operand.hbm [shape: f32[32,1024], index: 1, kind: output, shape index: {}]
  %s2 = sld [smem:[#allocation0]]
  $region41: #{tpu_custom_call.1} parent=0
    _
  %s4 = ssub.s32 1, %s2
  %s5 = scalar_select 0, %s4, %s2
  $region1: #{tpu_custom_call.1} parent=0
    #allocation2 [shape = 'u8[131072]{0}', space=vmem, size = 0x20000, scoped, tag = 'input window, operand 0']
    #allocation3 [shape = 's32[2]{0}', space=sflag, size = 0x8, scoped, tag = 'scoped memory for tpu_custom_call.1']
    #allocation4 [shape = 's32[2]{0}', space=sflag, size = 0x8, scoped, tag = 'scoped memory for tpu_custom_call.1']
    #allocation5 [shape = 'u8[131072]{0}', space=vmem, size = 0x20000, scoped, tag = 'output window, operand 0']
    %6 = vsyncpa [#allocation3], 0
    %s7 = scalar_lea.sflag [#allocation3], 1
    %8 = vsyncpa %s7, 0
    %9 = vsyncpa [#allocation4], 0
    %s10 = scalar_lea.sflag [#allocation4], 1
    %11 = vsyncpa %s10, 0
    loop: start=0, step=1, limit=4
    $region2: #{tpu_custom_call.1} parent=1 // loop_pre_header
      _
    $region3: #{tpu_custom_call.1} parent=1 // loop_header
      %s13 = sphi 0, %s17
      %p14 = scmp.ge.s32.totalorder %s13, 4
      %s23 = sphi 0, %s25
      %s26 = sphi 0, %s23
      %s27 = sphi 0, %s26
      %s43 = sphi 0, %s27
      %s49 = sphi 0, %s51
      %s52 = sphi 0, %s49
      %s53 = sphi 0, %s52
      %s69 = sphi 0, %s53
    $region4: #{tpu_custom_call.1} parent=1 // loop_header_branch
      %16 = sbr.rel (%p14) target = $region8
    $region5: #{tpu_custom_call.1} parent=1 // loop_body
      %s18 = ssub.s32 %s13, 1
      %s19 = ssub.s32 %s13, 2
      %s20 = sadd.s32 %s13, 1
      %s21 = ssub.s32 %s13, %s20
      %p22 = scmp.eq.s32.totalorder %s21, 0
      %s24 = sadd.s32 %s23, 1
      %s25 = scalar_select %p22, %s23, %s24
      %p28 = pneg %p22
      %p29 = scmp.eq.s32.totalorder %s13, 1
      %p30 = por %p28, %p29
      %p31 = scmp.ne.s32.totalorder %s23, %s26
      %p32 = scmp.eq.s32.totalorder %s13, 0
      %p33 = por %p31, %p32
      %p34 = scmp.ne.s32.totalorder %s23, %s26
      %p35 = scmp.eq.s32.totalorder %s18, 1
      %p36 = por %p34, %p35
      %p37 = scmp.ne.s32.totalorder %s26, %s27
      %p38 = scmp.eq.s32.totalorder %s18, 0
      %p39 = por %p37, %p38
      %p40 = scmp.ne.s32.totalorder %s26, %s27
      %p41 = scmp.eq.s32.totalorder %s19, 1
      %p42 = por %p40, %p41
      %p44 = scmp.ne.s32.totalorder %s27, %s43
      %p45 = scmp.eq.s32.totalorder %s19, 0
      %p46 = por %p44, %p45
      %s47 = ssub.s32 %s13, %s20
      %p48 = scmp.eq.s32.totalorder %s47, 0
      %s50 = sadd.s32 %s49, 1
      %s51 = scalar_select %p48, %s49, %s50
      %p54 = pneg %p48
      %p55 = scmp.eq.s32.totalorder %s13, 1
      %p56 = por %p54, %p55
      %p57 = scmp.ne.s32.totalorder %s49, %s52
      %p58 = scmp.eq.s32.totalorder %s13, 0
      %p59 = por %p57, %p58
      %p60 = scmp.ne.s32.totalorder %s49, %s52
      %p61 = scmp.eq.s32.totalorder %s18, 1
      %p62 = por %p60, %p61
      %p63 = scmp.ne.s32.totalorder %s52, %s53
      %p64 = scmp.eq.s32.totalorder %s18, 0
      %p65 = por %p63, %p64
      %p66 = scmp.ne.s32.totalorder %s52, %s53
      %p67 = scmp.eq.s32.totalorder %s19, 1
      %p68 = por %p66, %p67
      %p70 = scmp.ne.s32.totalorder %s53, %s69
      %p71 = scmp.eq.s32.totalorder %s19, 0
      %p72 = por %p70, %p71
      %p73 = scmp.le.s32.totalorder 1, %s13
      %p74 = scmp.lt.s32.totalorder %s13, 3
      %p75 = pnand %p73, %p74
      %p76 = pneg %p75
      // Predicated region
      $region9: #{tpu_custom_call.1} parent=5 // pred_check
        _
      $region10: #{tpu_custom_call.1} parent=5 // pred_check_branch
        %78 = sbr.rel (%p75) target = $region12
      $region11: #{tpu_custom_call.1} parent=5 // pred_region
        %s79 = ssub.s32 %s13, 1
      $region12: #{tpu_custom_call.1} parent=5 // pred_fallthru
        _
      %p80 = scmp.lt.s32.totalorder %s13, 2
      // Predicated region
      $region13: #{tpu_custom_call.1} parent=5 // pred_check
        %p81 = pneg %p80
      $region14: #{tpu_custom_call.1} parent=5 // pred_check_branch
        %83 = sbr.rel (%p81) target = $region16
      $region15: #{tpu_custom_call.1} parent=5 // pred_region
        // Predicated region
        $region17: #{tpu_custom_call.1} parent=15 // pred_check
          %p84 = pneg %p33
        $region18: #{tpu_custom_call.1} parent=15 // pred_check_branch
          %86 = sbr.rel (%p84) target = $region20
        $region19: #{tpu_custom_call.1} parent=15 // pred_region
          %s87 = sand.u32 %s23, 1
          %s88 = scalar_lea.sflag [#allocation3], %s87
          %s89 = sand.u32 %s23, 1
          %s90 = smul.addr %s89, 128
          %s91 = scalar_lea.vmem [#allocation2], %s90
          %s92 = smul.u32 2, %s13
          %94 = vsyncadd %s88, 0
          %s95 = smul.addr %s92, 8
          %s96 = smul.addr %s95, 8
          %s97 = scalar_lea.hbm %s0, %s96
          %s98 = sshll.u32 %s97, 4
          %s99 = int_to_ptr.hbm [resolvable:$true] %s98
          %s100 = sshll.u32 %s91, 4
          %s101 = int_to_ptr.vmem [resolvable:$true] %s100
          %106 = dma.hbm_to_vmem [thread:$0]  %s99, 2048, %s101, %s88, 1024, 1024, 64
        $region20: #{tpu_custom_call.1} parent=15 // pred_fallthru
          _
      $region16: #{tpu_custom_call.1} parent=5 // pred_fallthru
        _
      %p107 = scmp.le.s32.totalorder 1, %s13
      %p108 = scmp.lt.s32.totalorder %s13, 3
      %p109 = pnand %p107, %p108
      %p110 = pneg %p109
      // Predicated region
      $region21: #{tpu_custom_call.1} parent=5 // pred_check
        _
      $region22: #{tpu_custom_call.1} parent=5 // pred_check_branch
        %112 = sbr.rel (%p109) target = $region24
      $region23: #{tpu_custom_call.1} parent=5 // pred_region
        %s113 = ssub.s32 %s13, 1
        %s114 = sand.u32 %s26, 1
        %s115 = scalar_lea.sflag [#allocation3], %s114
        %s116 = sand.u32 %s26, 1
        %s117 = smul.addr %s116, 128
        %s118 = scalar_lea.vmem [#allocation2], %s117
        // Predicated region
        $region25: #{tpu_custom_call.1} parent=23 // pred_check
          %p119 = pneg %p39
        $region26: #{tpu_custom_call.1} parent=23 // pred_check_branch
          %121 = sbr.rel (%p119) target = $region28
        $region27: #{tpu_custom_call.1} parent=23 // pred_region
          %123 = dma.done %s115, 2048
        $region28: #{tpu_custom_call.1} parent=23 // pred_fallthru
          _
        %s124 = sand.u32 %s26, 1
        %s125 = scalar_lea.sflag [#allocation3], %s124
        %s126 = sand.u32 %s26, 1
        %s127 = smul.addr %s126, 128
        %s128 = scalar_lea.vmem [#allocation2], %s127
        %p129 = pneg %p39
        %p130 = pneg %p36
        %p131 = pneg %p65
        %p132 = pneg %p62
        %s133 = sand.u32 %s52, 1
        %s134 = scalar_lea.sflag [#allocation4], %s133
        %s135 = sand.u32 %s52, 1
        %s136 = smul.addr %s135, 128
        %s137 = scalar_lea.vmem [#allocation5], %s136
        %s138 = smul.u32 2, %s18
        %s139 = smul.u32 2, %s18
        %v140 = vld [vmem:[%s118] sm:$0xff]
        %v141 = vld [vmem:[%s118 + $0x8] sm:$0xff]
        %v142 = vld [vmem:[%s118 + $0x10] sm:$0xff]
        %v143 = vld [vmem:[%s118 + $0x18] sm:$0xff]
        %v144 = vld [vmem:[%s118 + $0x20] sm:$0xff]
        %v145 = vld [vmem:[%s118 + $0x28] sm:$0xff]
        %v146 = vld [vmem:[%s118 + $0x30] sm:$0xff]
        %v147 = vld [vmem:[%s118 + $0x38] sm:$0xff]
        %v148 = vld [vmem:[%s118 + $0x40] sm:$0xff]
        %v149 = vld [vmem:[%s118 + $0x48] sm:$0xff]
        %v150 = vld [vmem:[%s118 + $0x50] sm:$0xff]
        %v151 = vld [vmem:[%s118 + $0x58] sm:$0xff]
        %v152 = vld [vmem:[%s118 + $0x60] sm:$0xff]
        %v153 = vld [vmem:[%s118 + $0x68] sm:$0xff]
        %v154 = vld [vmem:[%s118 + $0x70] sm:$0xff]
        %v155 = vld [vmem:[%s118 + $0x78] sm:$0xff]
        %v156 = vcvt.s32.f32 %v140
        %v157 = vcvt.s32.f32 %v141
        %v158 = vcvt.s32.f32 %v142
        %v159 = vcvt.s32.f32 %v143
        %v160 = vcvt.s32.f32 %v144
        %v161 = vcvt.s32.f32 %v145
        %v162 = vcvt.s32.f32 %v146
        %v163 = vcvt.s32.f32 %v147
        %v164 = vcvt.s32.f32 %v148
        %v165 = vcvt.s32.f32 %v149
        %v166 = vcvt.s32.f32 %v150
        %v167 = vcvt.s32.f32 %v151
        %v168 = vcvt.s32.f32 %v152
        %v169 = vcvt.s32.f32 %v153
        %v170 = vcvt.s32.f32 %v154
        %v171 = vcvt.s32.f32 %v155
        %v172 = vmul.f32 %v156, 0.0078125
        %v173 = vmul.f32 %v157, 0.0078125
        %v174 = vmul.f32 %v158, 0.0078125
        %v175 = vmul.f32 %v159, 0.0078125
        %v176 = vmul.f32 %v160, 0.0078125
        %v177 = vmul.f32 %v161, 0.0078125
        %v178 = vmul.f32 %v162, 0.0078125
        %v179 = vmul.f32 %v163, 0.0078125
        %v180 = vmul.f32 %v164, 0.0078125
        %v181 = vmul.f32 %v165, 0.0078125
        %v182 = vmul.f32 %v166, 0.0078125
        %v183 = vmul.f32 %v167, 0.0078125
        %v184 = vmul.f32 %v168, 0.0078125
        %v185 = vmul.f32 %v169, 0.0078125
        %v186 = vmul.f32 %v170, 0.0078125
        %v187 = vmul.f32 %v171, 0.0078125
        %v188 = vsub.f32 %v172, 1.0
        %v189 = vsub.f32 %v173, 1.0
        %v190 = vsub.f32 %v174, 1.0
        %v191 = vsub.f32 %v175, 1.0
        %v192 = vsub.f32 %v176, 1.0
        %v193 = vsub.f32 %v177, 1.0
        %v194 = vsub.f32 %v178, 1.0
        %v195 = vsub.f32 %v179, 1.0
        %v196 = vsub.f32 %v180, 1.0
        %v197 = vsub.f32 %v181, 1.0
        %v198 = vsub.f32 %v182, 1.0
        %v199 = vsub.f32 %v183, 1.0
        %v200 = vsub.f32 %v184, 1.0
        %v201 = vsub.f32 %v185, 1.0
        %v202 = vsub.f32 %v186, 1.0
        %v203 = vsub.f32 %v187, 1.0
        %204 = vst [vmem:[%s137] sm:$0xff] %v188
        %205 = vst [vmem:[%s137 + $0x8] sm:$0xff] %v189
        %206 = vst [vmem:[%s137 + $0x10] sm:$0xff] %v190
        %207 = vst [vmem:[%s137 + $0x18] sm:$0xff] %v191
        %208 = vst [vmem:[%s137 + $0x20] sm:$0xff] %v192
        %209 = vst [vmem:[%s137 + $0x28] sm:$0xff] %v193
        %210 = vst [vmem:[%s137 + $0x30] sm:$0xff] %v194
        %211 = vst [vmem:[%s137 + $0x38] sm:$0xff] %v195
        %212 = vst [vmem:[%s137 + $0x40] sm:$0xff] %v196
        %213 = vst [vmem:[%s137 + $0x48] sm:$0xff] %v197
        %214 = vst [vmem:[%s137 + $0x50] sm:$0xff] %v198
        %215 = vst [vmem:[%s137 + $0x58] sm:$0xff] %v199
        %216 = vst [vmem:[%s137 + $0x60] sm:$0xff] %v200
        %217 = vst [vmem:[%s137 + $0x68] sm:$0xff] %v201
        %218 = vst [vmem:[%s137 + $0x70] sm:$0xff] %v202
        %219 = vst [vmem:[%s137 + $0x78] sm:$0xff] %v203
        %s220 = sand.u32 %s52, 1
        %s221 = scalar_lea.sflag [#allocation4], %s220
        %s222 = sand.u32 %s52, 1
        %s223 = smul.addr %s222, 128
        %s224 = scalar_lea.vmem [#allocation5], %s223
        // Predicated region
        $region29: #{tpu_custom_call.1} parent=23 // pred_check
          %p225 = pneg %p62
        $region30: #{tpu_custom_call.1} parent=23 // pred_check_branch
          %227 = sbr.rel (%p225) target = $region32
        $region31: #{tpu_custom_call.1} parent=23 // pred_region
          %s228 = smul.u32 2, %s18
          %230 = vsyncadd %s221, 0
          %s231 = smul.addr %s228, 8
          %s232 = smul.addr %s231, 8
          %s233 = scalar_lea.hbm %s1, %s232
          %s234 = sshll.u32 %s224, 4
          %s235 = int_to_ptr.vmem [resolvable:$true] %s234
          %s236 = sshll.u32 %s233, 4
          %s237 = int_to_ptr.hbm [resolvable:$true] %s236
          %242 = dma.vmem_to_hbm [thread:$0]  %s235, 2048, %s237, %s221, 1024, 1024, 64
        $region32: #{tpu_custom_call.1} parent=23 // pred_fallthru
          _
      $region24: #{tpu_custom_call.1} parent=5 // pred_fallthru
        _
      %p243 = scmp.le.s32.totalorder 2, %s13
      // Predicated region
      $region33: #{tpu_custom_call.1} parent=5 // pred_check
        %p244 = pneg %p243
      $region34: #{tpu_custom_call.1} parent=5 // pred_check_branch
        %246 = sbr.rel (%p244) target = $region36
      $region35: #{tpu_custom_call.1} parent=5 // pred_region
        %s247 = ssub.s32 %s13, 2
        // Predicated region
        $region37: #{tpu_custom_call.1} parent=35 // pred_check
          %p248 = pneg %p68
        $region38: #{tpu_custom_call.1} parent=35 // pred_check_branch
          %250 = sbr.rel (%p248) target = $region40
        $region39: #{tpu_custom_call.1} parent=35 // pred_region
          %s251 = sand.u32 %s53, 1
          %s252 = scalar_lea.sflag [#allocation4], %s251
          %s253 = sand.u32 %s53, 1
          %s254 = smul.addr %s253, 128
          %s255 = scalar_lea.vmem [#allocation5], %s254
          %257 = dma.done %s252, 2048
        $region40: #{tpu_custom_call.1} parent=35 // pred_fallthru
          _
      $region36: #{tpu_custom_call.1} parent=5 // pred_fallthru
        _
    $region6: #{tpu_custom_call.1} parent=1 // loop_footer
      %s17 = sadd.s32 1, %s13
    $region7: #{tpu_custom_call.1} parent=1 // loop_footer_branch
      %12 = sbr.rel target = $region3
    $region8: #{tpu_custom_call.1} parent=1 // loop_exit
      _
    %258 = vsyncpa [#allocation3], 1
    %s259 = scalar_lea.sflag [#allocation3], 1
    %260 = vsyncpa %s259, 1
    %261 = vsyncpa [#allocation4], 1
    %s262 = scalar_lea.sflag [#allocation4], 1
    %263 = vsyncpa %s262, 1

</llo_original>
